<compile_context>
chip_gen: v7x
topology: tpu7x:2x2x1
jax: 0.10.0
libtpu: 0.0.40
codegen_flags: <defaults>
</compile_context>

<pallas_src>
import functools

import jax
import jax.numpy as jnp
from jax.experimental import pallas as pl
from jax.experimental.pallas import tpu as pltpu

MOMENTUM = 0.9
EPS = 1e-5


def _bn_scale_shift(v, gamma, running_mean, running_var, batch):
    """NewBatchNorm1D (training=True, measure='SD') as per-column (scale, shift).

    out = gamma * (v - tmp_mean) / (tmp_var + eps) = v * scale + shift
    Two-pass (subtract-mean) variance, unbiased (batch >= 2 required).
    """
    mean = jnp.sum(v, axis=0, keepdims=True) * (1.0 / batch)          # (1, N)
    d = v - mean
    var = jnp.sum(d * d, axis=0, keepdims=True) * (1.0 / (batch - 1))  # unbiased
    tmp_mean = MOMENTUM * mean + (1.0 - MOMENTUM) * running_mean
    tmp_var = MOMENTUM * var + (1.0 - MOMENTUM) * running_var
    # Per-column approximate reciprocal on the EUP (N values), not B*N divides.
    scale = gamma * pl.reciprocal(tmp_var + EPS, approx=True)
    shift = -tmp_mean * scale
    return scale, shift


def lstm_cell_kernel(
    time_ref,        # SMEM scalar-prefetch (used only by index_maps)
    x_ref, h0_ref, c0_ref,
    w_in_ref, w_hid_ref,          # bf16 weights (pre-cast once, outside hot path)
    cw_ref,          # (3, 4H): [bias, bn_h_weight, bn_i_weight]
    cn_ref,          # (2, H):  [bn_c_weight, bn_c_bias]
    sw_ref,          # (1, 4, 4H): time-row of [rm_h, rv_h, rm_i, rv_i]
    sn_ref,          # (1, 2, H):  time-row of [rm_c, rv_c]
    h1_ref, c1_ref,  # two separate lane-dense outputs
    *, hidden_size, batch_size,
):
    del time_ref  # consumed by the BlockSpec index_maps
    H = hidden_size
    B = batch_size

    # MXU matmuls: cast activations to bf16 in-kernel (VPU), f32 accumulation.
    wh = jnp.dot(h0_ref[...].astype(jnp.bfloat16), w_hid_ref[...],
                 preferred_element_type=jnp.float32)
    wx = jnp.dot(x_ref[...].astype(jnp.bfloat16), w_in_ref[...],
                 preferred_element_type=jnp.float32)

    cw = cw_ref[...]
    bias = cw[0:1, :]
    g_h = cw[1:2, :]
    g_i = cw[2:3, :]
    sw = sw_ref[0]                       # (4, 4H)
    rm_h = sw[0:1, :]
    rv_h = sw[1:2, :]
    rm_i = sw[2:3, :]
    rv_i = sw[3:4, :]

    # bn_h / bn_i (use_bias=False), folded into a single fused gate construction.
    scale_h, shift_h = _bn_scale_shift(wh, g_h, rm_h, rv_h, B)
    scale_i, shift_i = _bn_scale_shift(wx, g_i, rm_i, rv_i, B)
    gates = wh * scale_h + wx * scale_i + (shift_h + shift_i + bias)   # (B, 4H)

    # Gate order [f | i | o | g]; H % 128 == 0 so all slices are lane-aligned.
    # One dense sigmoid over contiguous [f|i|o], one tanh over g (fewer EUP pushes).
    sig = jax.nn.sigmoid(gates[:, : 3 * H])
    g_t = jnp.tanh(gates[:, 3 * H:])
    f = sig[:, 0 * H:1 * H]
    i_g = sig[:, 1 * H:2 * H]
    o = sig[:, 2 * H:3 * H]

    c1 = f * c0_ref[...] + i_g * g_t

    cn = cn_ref[...]
    g_c = cn[0:1, :]
    b_c = cn[1:2, :]
    sn = sn_ref[0]                       # (2, H)
    rm_c = sn[0:1, :]
    rv_c = sn[1:2, :]

    # bn_c (use_bias=True)
    scale_c, shift_c = _bn_scale_shift(c1, g_c, rm_c, rv_c, B)
    h1 = o * jnp.tanh(c1 * scale_c + (shift_c + b_c))

    h1_ref[...] = h1.astype(h1_ref.dtype)
    c1_ref[...] = c1.astype(c1_ref.dtype)


def prepare_params(params):
    """One-time parameter prep (outside the hot path):

    * cache bf16 copies of the matmul weights,
    * pack the tiny constant rows into two small slabs,
    * pack the per-time running stats so one DMA fetches all rows for a given time.
    """
    H4 = params["weight_hidden"].shape[1]
    H = H4 // 4
    return {
        "w_in_bf16": params["weight_input"].astype(jnp.bfloat16),
        "w_hid_bf16": params["weight_hidden"].astype(jnp.bfloat16),
        "const_wide": jnp.stack(
            [params["bias"],
             params["bn_h_weight"].reshape(H4),
             params["bn_i_weight"].reshape(H4)], axis=0),              # (3, 4H)
        "const_narrow": jnp.stack(
            [params["bn_c_weight"].reshape(H),
             params["bn_c_bias"]], axis=0),                            # (2, H)
        "stats_wide": jnp.stack(
            [params["running_mean_h"], params["running_var_h"],
             params["running_mean_i"], params["running_var_i"]], axis=1),   # (T, 4, 4H)
        "stats_narrow": jnp.stack(
            [params["running_mean_c"], params["running_var_c"]], axis=1),   # (T, 2, H)
    }


def lstm_cell_forward(x, h0, c0, prep, time):
    """Pallas-backed LSTMCell.forward(input_, (h_0, c_0), time)."""
    B, H = h0.shape
    I = x.shape[1]
    H4 = 4 * H
    assert B >= 2, "unbiased std (torch.std) requires batch >= 2"
    assert H % 128 == 0, "hidden size must be a multiple of 128 for lane-dense gates"

    time_arr = jnp.asarray(time, dtype=jnp.int32).reshape((1,))

    # Scalar-prefetch grid spec: index_maps get (grid_i, time_ref); the running-stat
    # packs are DMA'd one time-row each directly from HBM.
    grid_spec = pltpu.PrefetchScalarGridSpec(
        num_scalar_prefetch=1,
        grid=(1,),
        in_specs=[
            pl.BlockSpec((B, I), lambda i, t: (0, 0)),          # x
            pl.BlockSpec((B, H), lambda i, t: (0, 0)),          # h0
            pl.BlockSpec((B, H), lambda i, t: (0, 0)),          # c0
            pl.BlockSpec((I, H4), lambda i, t: (0, 0)),         # W_in (bf16)
            pl.BlockSpec((H, H4), lambda i, t: (0, 0)),         # W_hid (bf16)
            pl.BlockSpec((3, H4), lambda i, t: (0, 0)),         # const_wide
            pl.BlockSpec((2, H), lambda i, t: (0, 0)),          # const_narrow
            pl.BlockSpec((1, 4, H4), lambda i, t: (t[0], 0, 0)),  # stats_wide[time]
            pl.BlockSpec((1, 2, H), lambda i, t: (t[0], 0, 0)),   # stats_narrow[time]
        ],
        out_specs=[
            pl.BlockSpec((B, H), lambda i, t: (0, 0)),          # h1
            pl.BlockSpec((B, H), lambda i, t: (0, 0)),          # c1
        ],
    )

    # Bytes actually moved by the kernel (selected stat rows only).
    io_bytes = int(
        x.nbytes + h0.nbytes + c0.nbytes
        + prep["w_in_bf16"].nbytes + prep["w_hid_bf16"].nbytes
        + prep["const_wide"].nbytes + prep["const_narrow"].nbytes
        + 4 * H4 * 4 + 2 * H * 4          # one time-row of each stats pack
        + 2 * B * H * 4                   # h1, c1
    )
    flops = 2 * B * (I + H) * H4
    transcendentals = 5 * B * H + 2 * H4 + H   # sigmoid/tanh pushes + approx reciprocals
    cost = pl.CostEstimate(flops=flops, transcendentals=transcendentals,
                           bytes_accessed=io_bytes)

    # VMEM budget from the actual buffers: double-buffered I/O blocks + live f32
    # intermediates (wh, wx, gates, sig ~ 4x(B,4H)) + headroom, floored for safety.
    vmem_limit = max(2 * io_bytes + 8 * B * H4 * 4 + (1 << 20), 8 << 20)

    kernel = functools.partial(lstm_cell_kernel, hidden_size=H, batch_size=B)
    h1, c1 = pl.pallas_call(
        kernel,
        out_shape=(jax.ShapeDtypeStruct((B, H), jnp.float32),
                   jax.ShapeDtypeStruct((B, H), jnp.float32)),
        grid_spec=grid_spec,
        compiler_params=pltpu.CompilerParams(
            dimension_semantics=("arbitrary",),
            vmem_limit_bytes=int(vmem_limit)),
        cost_estimate=cost,
    )(time_arr, x, h0, c0,
      prep["w_in_bf16"], prep["w_hid_bf16"],
      prep["const_wide"], prep["const_narrow"],
      prep["stats_wide"], prep["stats_narrow"])
    return h1, c1


# ----------------------------- reference (pure JAX, f32) -----------------------------
def _bn_sd_ref(v, gamma, beta, running_mean, running_var):
    b = v.shape[0]
    mean = jnp.mean(v, axis=0, keepdims=True)
    diff = v - mean
    std = jnp.sqrt(jnp.sum(diff * diff, axis=0, keepdims=True) / (b - 1))  # unbiased
    tmp_mean = MOMENTUM * mean + (1.0 - MOMENTUM) * running_mean
    tmp_var = MOMENTUM * std * std + (1.0 - MOMENTUM) * running_var
    out = gamma * (v - tmp_mean) / (tmp_var + EPS)
    if beta is not None:
        out = out + beta
    return out


def lstm_cell_reference(x, h0, c0, params, time):
    H = h0.shape[1]
    wh = h0 @ params["weight_hidden"]
    wx = x @ params["weight_input"]
    wh = _bn_sd_ref(wh, params["bn_h_weight"], None,
                    params["running_mean_h"][time][None, :],
                    params["running_var_h"][time][None, :])
    wx = _bn_sd_ref(wx, params["bn_i_weight"], None,
                    params["running_mean_i"][time][None, :],
                    params["running_var_i"][time][None, :])
    gates = wh + wx + params["bias"][None, :]
    f, i, o, g = gates[:, :H], gates[:, H:2 * H], gates[:, 2 * H:3 * H], gates[:, 3 * H:]
    c1 = jax.nn.sigmoid(f) * c0 + jax.nn.sigmoid(i) * jnp.tanh(g)
    bn_c1 = _bn_sd_ref(c1, params["bn_c_weight"], params["bn_c_bias"][None, :],
                       params["running_mean_c"][time][None, :],
                       params["running_var_c"][time][None, :])
    h1 = jax.nn.sigmoid(o) * jnp.tanh(bn_c1)
    return h1, c1


# ----------------------------- parameter init -----------------------------
def orthogonal_init(key, rows, cols):
    """Deterministic analogue of torch.nn.init.orthogonal_."""
    a = jax.random.normal(key, (max(rows, cols), min(rows, cols)), dtype=jnp.float32)
    q, r = jnp.linalg.qr(a)
    q = q * jnp.sign(jnp.diagonal(r))[None, :]
    if rows < cols:
        q = q.T
    return q.astype(jnp.float32)


def make_params(input_size, hidden_size, max_length=28):
    key = jax.random.PRNGKey(0)
    k_wi, k_wh = jax.random.split(key)
    H4 = 4 * hidden_size
    return {
        "weight_input": orthogonal_init(k_wi, input_size, H4),
        "weight_hidden": orthogonal_init(k_wh, hidden_size, H4),
        "bias": jnp.zeros((H4,), jnp.float32),
        "bn_h_weight": jnp.full((1, H4), 0.1, jnp.float32),
        "bn_i_weight": jnp.full((1, H4), 0.1, jnp.float32),
        "bn_c_weight": jnp.full((1, hidden_size), 0.1, jnp.float32),
        "bn_c_bias": jnp.zeros((hidden_size,), jnp.float32),
        "running_mean_h": jnp.zeros((max_length, H4), jnp.float32),
        "running_var_h": jnp.ones((max_length, H4), jnp.float32),
        "running_mean_i": jnp.zeros((max_length, H4), jnp.float32),
        "running_var_i": jnp.ones((max_length, H4), jnp.float32),
        "running_mean_c": jnp.zeros((max_length, hidden_size), jnp.float32),
        "running_var_c": jnp.ones((max_length, hidden_size), jnp.float32),
    }


if __name__ == "__main__":
    # H multiple of 128 (lane-dense gates/outputs); batch >= 2 (unbiased variance).
    batch, input_size, hidden_size = 8, 16, 128
    time = 3

    params = make_params(input_size, hidden_size)
    prep = prepare_params(params)   # one-time: bf16 weight cache + param/stat packing

    key = jax.random.PRNGKey(0)
    kx, kh, kc = jax.random.split(key, 3)
    x = jax.random.normal(kx, (batch, input_size), dtype=jnp.float32)
    h0 = jax.random.normal(kh, (batch, hidden_size), dtype=jnp.float32)
    c0 = jax.random.normal(kc, (batch, hidden_size), dtype=jnp.float32)

    h1, c1 = lstm_cell_forward(x, h0, c0, prep, time)
    jax.block_until_ready((h1, c1))

    h1_ref, c1_ref = lstm_cell_reference(x, h0, c0, params, time)
    assert h1.shape == (batch, hidden_size) and c1.shape == (batch, hidden_size)
    # Tolerance covers bf16 matmul operands + approx reciprocal vs. the f32 reference.
    assert jnp.allclose(h1, h1_ref, atol=5e-3, rtol=5e-3)
    assert jnp.allclose(c1, c1_ref, atol=5e-3, rtol=5e-3)

    print("KERNEL_OK")
</pallas_src>

<mosaic_0001>
module attributes {stable_mosaic.version = 11 : i64} {
  func.func @lstm_cell_kernel(%arg0: i32, %arg1: memref<1xi32, #tpu.memory_space<smem>>, %arg2: memref<8x16xf32, #tpu.memory_space<vmem>>, %arg3: memref<8x128xf32, #tpu.memory_space<vmem>>, %arg4: memref<8x128xf32, #tpu.memory_space<vmem>>, %arg5: memref<16x512xbf16, #tpu.memory_space<vmem>>, %arg6: memref<128x512xbf16, #tpu.memory_space<vmem>>, %arg7: memref<3x512xf32, #tpu.memory_space<vmem>>, %arg8: memref<2x128xf32, #tpu.memory_space<vmem>>, %arg9: memref<1x4x512xf32, #tpu.memory_space<vmem>>, %arg10: memref<1x2x128xf32, #tpu.memory_space<vmem>>, %arg11: memref<8x128xf32, #tpu.memory_space<vmem>>, %arg12: memref<8x128xf32, #tpu.memory_space<vmem>>) attributes {dimension_semantics = [#tpu.dimension_semantics<arbitrary>], iteration_bounds = array<i64: 1>, scalar_prefetch = 1 : i64, scratch_operands = 0 : i64, tpu.core_type = #tpu.core_type<tc>, window_params = [{pipeline_mode = #tpu.pipeline_mode<synchronous>, transform_indices = @transform_0, window_bounds = array<i64: 8, 16>}, {pipeline_mode = #tpu.pipeline_mode<synchronous>, transform_indices = @transform_1, window_bounds = array<i64: 8, 128>}, {pipeline_mode = #tpu.pipeline_mode<synchronous>, transform_indices = @transform_2, window_bounds = array<i64: 8, 128>}, {pipeline_mode = #tpu.pipeline_mode<synchronous>, transform_indices = @transform_3, window_bounds = array<i64: 16, 512>}, {pipeline_mode = #tpu.pipeline_mode<synchronous>, transform_indices = @transform_4, window_bounds = array<i64: 128, 512>}, {pipeline_mode = #tpu.pipeline_mode<synchronous>, transform_indices = @transform_5, window_bounds = array<i64: 3, 512>}, {pipeline_mode = #tpu.pipeline_mode<synchronous>, transform_indices = @transform_6, window_bounds = array<i64: 2, 128>}, {transform_indices = @transform_7, window_bounds = array<i64: 1, 4, 512>}, {transform_indices = @transform_8, window_bounds = array<i64: 1, 2, 128>}, {pipeline_mode = #tpu.pipeline_mode<synchronous>, transform_indices = @transform_9, window_bounds = array<i64: 8, 128>}, {pipeline_mode = #tpu.pipeline_mode<synchronous>, transform_indices = @transform_10, window_bounds = array<i64: 8, 128>}]} {
    %c0 = arith.constant 0 : index
    %c0_0 = arith.constant 0 : index
    %0 = vector.load %arg3[%c0, %c0_0] : memref<8x128xf32, #tpu.memory_space<vmem>>, vector<8x128xf32>
    %1 = arith.truncf %0 : vector<8x128xf32> to vector<8x128xbf16>
    %c0_1 = arith.constant 0 : index
    %c0_2 = arith.constant 0 : index
    %2 = vector.load %arg6[%c0_1, %c0_2] : memref<128x512xbf16, #tpu.memory_space<vmem>>, vector<128x512xbf16>
    %cst = arith.constant dense<0.000000e+00> : vector<8x512xf32>
    %3 = tpu.matmul %1, %2, %cst {dimension_numbers = #tpu.dot_dimension_numbers<[1], [0], [0], [1], [0, 0, 1, 1], [], []>} : vector<8x128xbf16>, vector<128x512xbf16>, vector<8x512xf32> -> vector<8x512xf32>
    %c0_3 = arith.constant 0 : index
    %c0_4 = arith.constant 0 : index
    %4 = vector.load %arg2[%c0_3, %c0_4] : memref<8x16xf32, #tpu.memory_space<vmem>>, vector<8x16xf32>
    %5 = arith.truncf %4 : vector<8x16xf32> to vector<8x16xbf16>
    %c0_5 = arith.constant 0 : index
    %c0_6 = arith.constant 0 : index
    %6 = vector.load %arg5[%c0_5, %c0_6] : memref<16x512xbf16, #tpu.memory_space<vmem>>, vector<16x512xbf16>
    %cst_7 = arith.constant dense<0.000000e+00> : vector<8x512xf32>
    %7 = tpu.matmul %5, %6, %cst_7 {dimension_numbers = #tpu.dot_dimension_numbers<[1], [0], [0], [1], [0, 0, 1, 1], [], []>} : vector<8x16xbf16>, vector<16x512xbf16>, vector<8x512xf32> -> vector<8x512xf32>
    %c0_8 = arith.constant 0 : index
    %c0_9 = arith.constant 0 : index
    %8 = vector.load %arg7[%c0_8, %c0_9] : memref<3x512xf32, #tpu.memory_space<vmem>>, vector<3x512xf32>
    %9 = vector.extract_strided_slice %8 {offsets = [0, 0], sizes = [1, 512], strides = [1, 1]} : vector<3x512xf32> to vector<1x512xf32>
    %10 = vector.extract_strided_slice %8 {offsets = [1, 0], sizes = [1, 512], strides = [1, 1]} : vector<3x512xf32> to vector<1x512xf32>
    %11 = vector.extract_strided_slice %8 {offsets = [2, 0], sizes = [1, 512], strides = [1, 1]} : vector<3x512xf32> to vector<1x512xf32>
    %c0_10 = arith.constant 0 : index
    %c0_11 = arith.constant 0 : index
    %c0_12 = arith.constant 0 : index
    %12 = vector.load %arg9[%c0_10, %c0_11, %c0_12] : memref<1x4x512xf32, #tpu.memory_space<vmem>>, vector<1x4x512xf32>
    %13 = vector.shape_cast %12 : vector<1x4x512xf32> to vector<4x512xf32>
    %14 = vector.extract_strided_slice %13 {offsets = [0, 0], sizes = [1, 512], strides = [1, 1]} : vector<4x512xf32> to vector<1x512xf32>
    %15 = vector.extract_strided_slice %13 {offsets = [1, 0], sizes = [1, 512], strides = [1, 1]} : vector<4x512xf32> to vector<1x512xf32>
    %16 = vector.extract_strided_slice %13 {offsets = [2, 0], sizes = [1, 512], strides = [1, 1]} : vector<4x512xf32> to vector<1x512xf32>
    %17 = vector.extract_strided_slice %13 {offsets = [3, 0], sizes = [1, 512], strides = [1, 1]} : vector<4x512xf32> to vector<1x512xf32>
    %cst_13 = arith.constant dense<0.000000e+00> : vector<512xf32>
    %18 = vector.multi_reduction <add>, %3, %cst_13 [0] : vector<8x512xf32> to vector<512xf32>
    %19 = vector.shape_cast %18 : vector<512xf32> to vector<1x512xf32>
    %cst_14 = arith.constant 1.250000e-01 : f32
    %20 = vector.broadcast %cst_14 : f32 to vector<1x512xf32>
    %21 = arith.mulf %19, %20 : vector<1x512xf32>
    %22 = vector.broadcast %21 : vector<1x512xf32> to vector<8x512xf32>
    %23 = arith.subf %3, %22 : vector<8x512xf32>
    %24 = arith.mulf %23, %23 : vector<8x512xf32>
    %cst_15 = arith.constant dense<0.000000e+00> : vector<512xf32>
    %25 = vector.multi_reduction <add>, %24, %cst_15 [0] : vector<8x512xf32> to vector<512xf32>
    %26 = vector.shape_cast %25 : vector<512xf32> to vector<1x512xf32>
    %cst_16 = arith.constant 0.142857149 : f32
    %27 = vector.broadcast %cst_16 : f32 to vector<1x512xf32>
    %28 = arith.mulf %26, %27 : vector<1x512xf32>
    %cst_17 = arith.constant 0.899999976 : f32
    %29 = vector.broadcast %cst_17 : f32 to vector<1x512xf32>
    %30 = arith.mulf %29, %21 : vector<1x512xf32>
    %cst_18 = arith.constant 1.000000e-01 : f32
    %31 = vector.broadcast %cst_18 : f32 to vector<1x512xf32>
    %32 = arith.mulf %31, %14 : vector<1x512xf32>
    %33 = arith.addf %30, %32 : vector<1x512xf32>
    %cst_19 = arith.constant 0.899999976 : f32
    %34 = vector.broadcast %cst_19 : f32 to vector<1x512xf32>
    %35 = arith.mulf %34, %28 : vector<1x512xf32>
    %cst_20 = arith.constant 1.000000e-01 : f32
    %36 = vector.broadcast %cst_20 : f32 to vector<1x512xf32>
    %37 = arith.mulf %36, %15 : vector<1x512xf32>
    %38 = arith.addf %35, %37 : vector<1x512xf32>
    %cst_21 = arith.constant 9.99999974E-6 : f32
    %39 = vector.broadcast %cst_21 : f32 to vector<1x512xf32>
    %40 = arith.addf %38, %39 : vector<1x512xf32>
    %41 = tpu.reciprocal %40 {approx = true} : vector<1x512xf32> -> vector<1x512xf32>
    %42 = arith.mulf %10, %41 : vector<1x512xf32>
    %cst_22 = arith.constant 0.000000e+00 : f32
    %43 = vector.broadcast %cst_22 : f32 to vector<1x512xf32>
    %44 = arith.subf %43, %33 : vector<1x512xf32>
    %45 = arith.mulf %44, %42 : vector<1x512xf32>
    %cst_23 = arith.constant dense<0.000000e+00> : vector<512xf32>
    %46 = vector.multi_reduction <add>, %7, %cst_23 [0] : vector<8x512xf32> to vector<512xf32>
    %47 = vector.shape_cast %46 : vector<512xf32> to vector<1x512xf32>
    %cst_24 = arith.constant 1.250000e-01 : f32
    %48 = vector.broadcast %cst_24 : f32 to vector<1x512xf32>
    %49 = arith.mulf %47, %48 : vector<1x512xf32>
    %50 = vector.broadcast %49 : vector<1x512xf32> to vector<8x512xf32>
    %51 = arith.subf %7, %50 : vector<8x512xf32>
    %52 = arith.mulf %51, %51 : vector<8x512xf32>
    %cst_25 = arith.constant dense<0.000000e+00> : vector<512xf32>
    %53 = vector.multi_reduction <add>, %52, %cst_25 [0] : vector<8x512xf32> to vector<512xf32>
    %54 = vector.shape_cast %53 : vector<512xf32> to vector<1x512xf32>
    %cst_26 = arith.constant 0.142857149 : f32
    %55 = vector.broadcast %cst_26 : f32 to vector<1x512xf32>
    %56 = arith.mulf %54, %55 : vector<1x512xf32>
    %cst_27 = arith.constant 0.899999976 : f32
    %57 = vector.broadcast %cst_27 : f32 to vector<1x512xf32>
    %58 = arith.mulf %57, %49 : vector<1x512xf32>
    %cst_28 = arith.constant 1.000000e-01 : f32
    %59 = vector.broadcast %cst_28 : f32 to vector<1x512xf32>
    %60 = arith.mulf %59, %16 : vector<1x512xf32>
    %61 = arith.addf %58, %60 : vector<1x512xf32>
    %cst_29 = arith.constant 0.899999976 : f32
    %62 = vector.broadcast %cst_29 : f32 to vector<1x512xf32>
    %63 = arith.mulf %62, %56 : vector<1x512xf32>
    %cst_30 = arith.constant 1.000000e-01 : f32
    %64 = vector.broadcast %cst_30 : f32 to vector<1x512xf32>
    %65 = arith.mulf %64, %17 : vector<1x512xf32>
    %66 = arith.addf %63, %65 : vector<1x512xf32>
    %cst_31 = arith.constant 9.99999974E-6 : f32
    %67 = vector.broadcast %cst_31 : f32 to vector<1x512xf32>
    %68 = arith.addf %66, %67 : vector<1x512xf32>
    %69 = tpu.reciprocal %68 {approx = true} : vector<1x512xf32> -> vector<1x512xf32>
    %70 = arith.mulf %11, %69 : vector<1x512xf32>
    %cst_32 = arith.constant 0.000000e+00 : f32
    %71 = vector.broadcast %cst_32 : f32 to vector<1x512xf32>
    %72 = arith.subf %71, %61 : vector<1x512xf32>
    %73 = arith.mulf %72, %70 : vector<1x512xf32>
    %74 = vector.broadcast %42 : vector<1x512xf32> to vector<8x512xf32>
    %75 = arith.mulf %3, %74 : vector<8x512xf32>
    %76 = vector.broadcast %70 : vector<1x512xf32> to vector<8x512xf32>
    %77 = arith.mulf %7, %76 : vector<8x512xf32>
    %78 = arith.addf %75, %77 : vector<8x512xf32>
    %79 = arith.addf %45, %73 : vector<1x512xf32>
    %80 = arith.addf %79, %9 : vector<1x512xf32>
    %81 = vector.broadcast %80 : vector<1x512xf32> to vector<8x512xf32>
    %82 = arith.addf %78, %81 : vector<8x512xf32>
    %83 = vector.extract_strided_slice %82 {offsets = [0, 0], sizes = [8, 384], strides = [1, 1]} : vector<8x512xf32> to vector<8x384xf32>
    %84 = arith.negf %83 : vector<8x384xf32>
    %85 = math.exp %84 : vector<8x384xf32>
    %cst_33 = arith.constant 1.000000e+00 : f32
    %86 = vector.broadcast %cst_33 : f32 to vector<8x384xf32>
    %87 = arith.addf %86, %85 : vector<8x384xf32>
    %88 = arith.divf %86, %87 : vector<8x384xf32>
    %89 = vector.extract_strided_slice %82 {offsets = [0, 384], sizes = [8, 128], strides = [1, 1]} : vector<8x512xf32> to vector<8x128xf32>
    %90 = math.tanh %89 : vector<8x128xf32>
    %91 = vector.extract_strided_slice %88 {offsets = [0, 0], sizes = [8, 128], strides = [1, 1]} : vector<8x384xf32> to vector<8x128xf32>
    %92 = vector.extract_strided_slice %88 {offsets = [0, 128], sizes = [8, 128], strides = [1, 1]} : vector<8x384xf32> to vector<8x128xf32>
    %93 = vector.extract_strided_slice %88 {offsets = [0, 256], sizes = [8, 128], strides = [1, 1]} : vector<8x384xf32> to vector<8x128xf32>
    %c0_34 = arith.constant 0 : index
    %c0_35 = arith.constant 0 : index
    %94 = vector.load %arg4[%c0_34, %c0_35] : memref<8x128xf32, #tpu.memory_space<vmem>>, vector<8x128xf32>
    %95 = arith.mulf %91, %94 : vector<8x128xf32>
    %96 = arith.mulf %92, %90 : vector<8x128xf32>
    %97 = arith.addf %95, %96 : vector<8x128xf32>
    %c0_36 = arith.constant 0 : index
    %c0_37 = arith.constant 0 : index
    %98 = vector.load %arg8[%c0_36, %c0_37] : memref<2x128xf32, #tpu.memory_space<vmem>>, vector<2x128xf32>
    %99 = vector.extract_strided_slice %98 {offsets = [0, 0], sizes = [1, 128], strides = [1, 1]} : vector<2x128xf32> to vector<1x128xf32>
    %100 = vector.extract_strided_slice %98 {offsets = [1, 0], sizes = [1, 128], strides = [1, 1]} : vector<2x128xf32> to vector<1x128xf32>
    %c0_38 = arith.constant 0 : index
    %c0_39 = arith.constant 0 : index
    %c0_40 = arith.constant 0 : index
    %101 = vector.load %arg10[%c0_38, %c0_39, %c0_40] : memref<1x2x128xf32, #tpu.memory_space<vmem>>, vector<1x2x128xf32>
    %102 = vector.shape_cast %101 : vector<1x2x128xf32> to vector<2x128xf32>
    %103 = vector.extract_strided_slice %102 {offsets = [0, 0], sizes = [1, 128], strides = [1, 1]} : vector<2x128xf32> to vector<1x128xf32>
    %104 = vector.extract_strided_slice %102 {offsets = [1, 0], sizes = [1, 128], strides = [1, 1]} : vector<2x128xf32> to vector<1x128xf32>
    %cst_41 = arith.constant dense<0.000000e+00> : vector<128xf32>
    %105 = vector.multi_reduction <add>, %97, %cst_41 [0] : vector<8x128xf32> to vector<128xf32>
    %106 = vector.shape_cast %105 : vector<128xf32> to vector<1x128xf32>
    %cst_42 = arith.constant 1.250000e-01 : f32
    %107 = vector.broadcast %cst_42 : f32 to vector<1x128xf32>
    %108 = arith.mulf %106, %107 : vector<1x128xf32>
    %109 = vector.broadcast %108 : vector<1x128xf32> to vector<8x128xf32>
    %110 = arith.subf %97, %109 : vector<8x128xf32>
    %111 = arith.mulf %110, %110 : vector<8x128xf32>
    %cst_43 = arith.constant dense<0.000000e+00> : vector<128xf32>
    %112 = vector.multi_reduction <add>, %111, %cst_43 [0] : vector<8x128xf32> to vector<128xf32>
    %113 = vector.shape_cast %112 : vector<128xf32> to vector<1x128xf32>
    %cst_44 = arith.constant 0.142857149 : f32
    %114 = vector.broadcast %cst_44 : f32 to vector<1x128xf32>
    %115 = arith.mulf %113, %114 : vector<1x128xf32>
    %cst_45 = arith.constant 0.899999976 : f32
    %116 = vector.broadcast %cst_45 : f32 to vector<1x128xf32>
    %117 = arith.mulf %116, %108 : vector<1x128xf32>
    %cst_46 = arith.constant 1.000000e-01 : f32
    %118 = vector.broadcast %cst_46 : f32 to vector<1x128xf32>
    %119 = arith.mulf %118, %103 : vector<1x128xf32>
    %120 = arith.addf %117, %119 : vector<1x128xf32>
    %cst_47 = arith.constant 0.899999976 : f32
    %121 = vector.broadcast %cst_47 : f32 to vector<1x128xf32>
    %122 = arith.mulf %121, %115 : vector<1x128xf32>
    %cst_48 = arith.constant 1.000000e-01 : f32
    %123 = vector.broadcast %cst_48 : f32 to vector<1x128xf32>
    %124 = arith.mulf %123, %104 : vector<1x128xf32>
    %125 = arith.addf %122, %124 : vector<1x128xf32>
    %cst_49 = arith.constant 9.99999974E-6 : f32
    %126 = vector.broadcast %cst_49 : f32 to vector<1x128xf32>
    %127 = arith.addf %125, %126 : vector<1x128xf32>
    %128 = tpu.reciprocal %127 {approx = true} : vector<1x128xf32> -> vector<1x128xf32>
    %129 = arith.mulf %99, %128 : vector<1x128xf32>
    %cst_50 = arith.constant 0.000000e+00 : f32
    %130 = vector.broadcast %cst_50 : f32 to vector<1x128xf32>
    %131 = arith.subf %130, %120 : vector<1x128xf32>
    %132 = arith.mulf %131, %129 : vector<1x128xf32>
    %133 = vector.broadcast %129 : vector<1x128xf32> to vector<8x128xf32>
    %134 = arith.mulf %97, %133 : vector<8x128xf32>
    %135 = arith.addf %132, %100 : vector<1x128xf32>
    %136 = vector.broadcast %135 : vector<1x128xf32> to vector<8x128xf32>
    %137 = arith.addf %134, %136 : vector<8x128xf32>
    %138 = math.tanh %137 : vector<8x128xf32>
    %139 = arith.mulf %93, %138 : vector<8x128xf32>
    %c0_51 = arith.constant 0 : index
    %c0_52 = arith.constant 0 : index
    %140 = vector.load %arg11[%c0_51, %c0_52] : memref<8x128xf32, #tpu.memory_space<vmem>>, vector<8x128xf32>
    tpu.vector_store %arg11[%c0_51, %c0_52], %139 {strides = array<i32>} : memref<8x128xf32, #tpu.memory_space<vmem>>, vector<8x128xf32>,
    %c0_53 = arith.constant 0 : index
    %c0_54 = arith.constant 0 : index
    %141 = vector.load %arg12[%c0_53, %c0_54] : memref<8x128xf32, #tpu.memory_space<vmem>>, vector<8x128xf32>
    tpu.vector_store %arg12[%c0_53, %c0_54], %97 {strides = array<i32>} : memref<8x128xf32, #tpu.memory_space<vmem>>, vector<8x128xf32>,
    return
  }
  func.func @transform_0(%arg0: i32, %arg1: memref<1xi32, #tpu.memory_space<smem>>) -> (i32, i32) {
    %c0_i32 = arith.constant 0 : i32
    %c0_i32_0 = arith.constant 0 : i32
    %c0_i32_1 = arith.constant 0 : i32
    return %c0_i32, %c0_i32_0 : i32, i32
  }
  func.func @transform_1(%arg0: i32, %arg1: memref<1xi32, #tpu.memory_space<smem>>) -> (i32, i32) {
    %c0_i32 = arith.constant 0 : i32
    %c0_i32_0 = arith.constant 0 : i32
    %c0_i32_1 = arith.constant 0 : i32
    return %c0_i32, %c0_i32_0 : i32, i32
  }
  func.func @transform_2(%arg0: i32, %arg1: memref<1xi32, #tpu.memory_space<smem>>) -> (i32, i32) {
    %c0_i32 = arith.constant 0 : i32
    %c0_i32_0 = arith.constant 0 : i32
    %c0_i32_1 = arith.constant 0 : i32
    return %c0_i32, %c0_i32_0 : i32, i32
  }
  func.func @transform_3(%arg0: i32, %arg1: memref<1xi32, #tpu.memory_space<smem>>) -> (i32, i32) {
    %c0_i32 = arith.constant 0 : i32
    %c0_i32_0 = arith.constant 0 : i32
    %c0_i32_1 = arith.constant 0 : i32
    return %c0_i32, %c0_i32_0 : i32, i32
  }
  func.func @transform_4(%arg0: i32, %arg1: memref<1xi32, #tpu.memory_space<smem>>) -> (i32, i32) {
    %c0_i32 = arith.constant 0 : i32
    %c0_i32_0 = arith.constant 0 : i32
    %c0_i32_1 = arith.constant 0 : i32
    return %c0_i32, %c0_i32_0 : i32, i32
  }
  func.func @transform_5(%arg0: i32, %arg1: memref<1xi32, #tpu.memory_space<smem>>) -> (i32, i32) {
    %c0_i32 = arith.constant 0 : i32
    %c0_i32_0 = arith.constant 0 : i32
    %c0_i32_1 = arith.constant 0 : i32
    return %c0_i32, %c0_i32_0 : i32, i32
  }
  func.func @transform_6(%arg0: i32, %arg1: memref<1xi32, #tpu.memory_space<smem>>) -> (i32, i32) {
    %c0_i32 = arith.constant 0 : i32
    %c0_i32_0 = arith.constant 0 : i32
    %c0_i32_1 = arith.constant 0 : i32
    return %c0_i32, %c0_i32_0 : i32, i32
  }
  func.func @transform_7(%arg0: i32, %arg1: memref<1xi32, #tpu.memory_space<smem>>) -> (i32, i32, i32) {
    %c0 = arith.constant 0 : index
    %0 = memref.load %arg1[%c0] : memref<1xi32, #tpu.memory_space<smem>>
    %c0_i32 = arith.constant 0 : i32
    %c0_i32_0 = arith.constant 0 : i32
    %c0_i32_1 = arith.constant 0 : i32
    return %0, %c0_i32, %c0_i32_0 : i32, i32, i32
  }
  func.func @transform_8(%arg0: i32, %arg1: memref<1xi32, #tpu.memory_space<smem>>) -> (i32, i32, i32) {
    %c0 = arith.constant 0 : index
    %0 = memref.load %arg1[%c0] : memref<1xi32, #tpu.memory_space<smem>>
    %c0_i32 = arith.constant 0 : i32
    %c0_i32_0 = arith.constant 0 : i32
    %c0_i32_1 = arith.constant 0 : i32
    return %0, %c0_i32, %c0_i32_0 : i32, i32, i32
  }
  func.func @transform_9(%arg0: i32, %arg1: memref<1xi32, #tpu.memory_space<smem>>) -> (i32, i32) {
    %c0_i32 = arith.constant 0 : i32
    %c0_i32_0 = arith.constant 0 : i32
    %c0_i32_1 = arith.constant 0 : i32
    return %c0_i32, %c0_i32_0 : i32, i32
  }
  func.func @transform_10(%arg0: i32, %arg1: memref<1xi32, #tpu.memory_space<smem>>) -> (i32, i32) {
    %c0_i32 = arith.constant 0 : i32
    %c0_i32_0 = arith.constant 0 : i32
    %c0_i32_1 = arith.constant 0 : i32
    return %c0_i32, %c0_i32_0 : i32, i32
  }
}

</mosaic_0001>

<llo_original>
// kernel: tpu_custom_call.1
$region0: #{tpu_custom_call.1}
  #allocation0 [shape = 'u32[]', space=smem, size = 0x4, offset = 0x4, fixed_abs, tag = 'smem constant byte address 0x4 - core index']
  #allocation1 [shape = 'u32[144,128]{1,0:T(1,128)}', space=vmem, size = 0x12000, scoped, tag = 'internal scratch']
  #allocation2 [shape = 's32[1]{0}', space=sflag, size = 0x4, scoped, tag = 'scoped memory for tpu_custom_call.1']
  #allocation3 [shape = 's32[1]{0:T(128)S(6)}', space=smem, size = 0x200, scoped, tag = 'prefetched SMEM operand 0']
  %s0 = inlined_call_operand.<no memory space> [shape: s32[1], index: 0, kind: input, shape index: {}]
  %s1 = inlined_call_operand.hbm [shape: f32[8,16], index: 1, kind: input, shape index: {}]
  %s2 = inlined_call_operand.hbm [shape: f32[8,128], index: 2, kind: input, shape index: {}]
  %s3 = inlined_call_operand.hbm [shape: f32[8,128], index: 3, kind: input, shape index: {}]
  %s4 = inlined_call_operand.hbm [shape: bf16[16,512], index: 4, kind: input, shape index: {}]
  %s5 = inlined_call_operand.hbm [shape: bf16[128,512], index: 5, kind: input, shape index: {}]
  %s6 = inlined_call_operand.vmem [shape: f32[3,512], index: 6, kind: input, shape index: {}]
  %s7 = inlined_call_operand.vmem [shape: f32[2,128], index: 7, kind: input, shape index: {}]
  %s8 = inlined_call_operand.hbm [shape: f32[28,4,512], index: 8, kind: input, shape index: {}]
  %s9 = inlined_call_operand.hbm [shape: f32[28,2,128], index: 9, kind: input, shape index: {}]
  %s10 = inlined_call_operand.hbm [shape: f32[8,128], index: 10, kind: output, shape index: {0}]
  %s11 = inlined_call_operand.hbm [shape: f32[8,128], index: 11, kind: output, shape index: {1}]
  %12 = xla_tuple %s10, %s11
  %s13 = sld [smem:[#allocation0]]
  $region82: #{tpu_custom_call.1} parent=0
    _
  %s15 = ssub.s32 1, %s13
  %s16 = scalar_select 0, %s15, %s13
  %17 = sst [smem:[#allocation3]] %s0
  $region1: #{tpu_custom_call.1} parent=0
    #allocation4 [shape = 'u8[4096]{0}', space=vmem, size = 0x1000, scoped, tag = 'input window, operand 1, single buffered']
    #allocation5 [shape = 's32[1]{0}', space=sflag, size = 0x4, scoped, tag = 'scoped memory for tpu_custom_call.1']
    #allocation6 [shape = 's32[1]{0}', space=sflag, size = 0x4, scoped, tag = 'scoped memory for tpu_custom_call.1']
    #allocation7 [shape = 'u8[4096]{0}', space=vmem, size = 0x1000, scoped, tag = 'input window, operand 2, single buffered']
    #allocation8 [shape = 's32[1]{0}', space=sflag, size = 0x4, scoped, tag = 'scoped memory for tpu_custom_call.1']
    #allocation9 [shape = 'u8[4096]{0}', space=vmem, size = 0x1000, scoped, tag = 'input window, operand 3, single buffered']
    #allocation10 [shape = 'u8[16384]{0}', space=vmem, size = 0x4000, scoped, tag = 'input window, operand 4, single buffered']
    #allocation11 [shape = 's32[1]{0}', space=sflag, size = 0x4, scoped, tag = 'scoped memory for tpu_custom_call.1']
    #allocation12 [shape = 'u8[131072]{0}', space=vmem, size = 0x20000, scoped, tag = 'input window, operand 5, single buffered']
    #allocation13 [shape = 'u8[8192]{0}', space=vmem, size = 0x2000, scoped, tag = 'input window, operand 8, single buffered']
    #allocation14 [shape = 's32[1]{0}', space=sflag, size = 0x4, scoped, tag = 'scoped memory for tpu_custom_call.1']
    #allocation15 [shape = 'u8[1024]{0}', space=vmem, size = 0x400, scoped, tag = 'input window, operand 9, single buffered']
    #allocation16 [shape = 'u8[4096]{0}', space=vmem, size = 0x1000, scoped, tag = 'output window, operand 0, single buffered']
    #allocation17 [shape = 'u8[4096]{0}', space=vmem, size = 0x1000, scoped, tag = 'output window, operand 1, single buffered']
    #allocation18 [shape = 's32[1]{0}', space=sflag, size = 0x4, scoped, tag = 'scoped memory for tpu_custom_call.1']
    %18 = vsyncpa [#allocation5], 0
    %19 = vsyncpa [#allocation8], 0
    %20 = vsyncpa [#allocation11], 0
    %21 = vsyncpa [#allocation14], 0
    %22 = vsyncpa [#allocation6], 0
    %23 = vsyncpa [#allocation18], 0
    // Predicated region
    $region2: #{tpu_custom_call.1} parent=1 // pred_check
      _
    $region3: #{tpu_custom_call.1} parent=1 // pred_check_branch
      %25 = sbr.rel (0) target = $region5
    $region4: #{tpu_custom_call.1} parent=1 // pred_region
      %s27 = ssub.s32 128, 128
      %28 = vsyncadd [#allocation5], %s27
      %s30 = sshll.u32 [#allocation4], 4
      %s31 = int_to_ptr.vmem [resolvable:$true] %s30
      %33 = dma.hbm_to_vmem [thread:$0]  %s1, 128, %s31, [#allocation5]
    $region5: #{tpu_custom_call.1} parent=1 // pred_fallthru
      _
    // Predicated region
    $region6: #{tpu_custom_call.1} parent=1 // pred_check
      _
    $region7: #{tpu_custom_call.1} parent=1 // pred_check_branch
      %35 = sbr.rel (0) target = $region9
    $region8: #{tpu_custom_call.1} parent=1 // pred_region
      %s37 = ssub.s32 128, 128
      %38 = vsyncadd [#allocation8], %s37
      %s40 = sshll.u32 [#allocation7], 4
      %s41 = int_to_ptr.vmem [resolvable:$true] %s40
      %43 = dma.hbm_to_vmem [thread:$0]  %s2, 128, %s41, [#allocation8]
    $region9: #{tpu_custom_call.1} parent=1 // pred_fallthru
      _
    // Predicated region
    $region10: #{tpu_custom_call.1} parent=1 // pred_check
      _
    $region11: #{tpu_custom_call.1} parent=1 // pred_check_branch
      %45 = sbr.rel (0) target = $region13
    $region12: #{tpu_custom_call.1} parent=1 // pred_region
      %s47 = ssub.s32 128, 128
      %48 = vsyncadd [#allocation8], %s47
      %s50 = sshll.u32 [#allocation9], 4
      %s51 = int_to_ptr.vmem [resolvable:$true] %s50
      %53 = dma.hbm_to_vmem [thread:$0]  %s3, 128, %s51, [#allocation8]
    $region13: #{tpu_custom_call.1} parent=1 // pred_fallthru
      _
    // Predicated region
    $region14: #{tpu_custom_call.1} parent=1 // pred_check
      _
    $region15: #{tpu_custom_call.1} parent=1 // pred_check_branch
      %55 = sbr.rel (0) target = $region17
    $region16: #{tpu_custom_call.1} parent=1 // pred_region
      %s57 = ssub.s32 512, 512
      %58 = vsyncadd [#allocation11], %s57
      %s59 = sshll.u32 [#allocation10], 4
      %s60 = int_to_ptr.vmem [resolvable:$true] %s59
      %65 = dma.hbm_to_vmem [thread:$0]  %s4, 512, %s60, [#allocation11], 256, 256, 16
    $region17: #{tpu_custom_call.1} parent=1 // pred_fallthru
      _
    // Predicated region
    $region18: #{tpu_custom_call.1} parent=1 // pred_check
      _
    $region19: #{tpu_custom_call.1} parent=1 // pred_check_branch
      %67 = sbr.rel (0) target = $region21
    $region20: #{tpu_custom_call.1} parent=1 // pred_region
      %s69 = ssub.s32 4096, 4096
      %70 = vsyncadd [#allocation11], %s69
      %s71 = sshll.u32 [#allocation12], 4
      %s72 = int_to_ptr.vmem [resolvable:$true] %s71
      %77 = dma.hbm_to_vmem [thread:$0]  %s5, 4096, %s72, [#allocation11], 256, 256, 16
    $region21: #{tpu_custom_call.1} parent=1 // pred_fallthru
      _
    // Predicated region
    $region22: #{tpu_custom_call.1} parent=1 // pred_check
      _
    $region23: #{tpu_custom_call.1} parent=1 // pred_check_branch
      %79 = sbr.rel (0) target = $region25
    $region24: #{tpu_custom_call.1} parent=1 // pred_region
      _
    $region25: #{tpu_custom_call.1} parent=1 // pred_fallthru
      _
    // Predicated region
    $region26: #{tpu_custom_call.1} parent=1 // pred_check
      _
    $region27: #{tpu_custom_call.1} parent=1 // pred_check_branch
      %81 = sbr.rel (0) target = $region29
    $region28: #{tpu_custom_call.1} parent=1 // pred_region
      _
    $region29: #{tpu_custom_call.1} parent=1 // pred_fallthru
      _
    // Predicated region
    $region30: #{tpu_custom_call.1} parent=1 // pred_check
      _
    $region31: #{tpu_custom_call.1} parent=1 // pred_check_branch
      %83 = sbr.rel (0) target = $region33
    $region32: #{tpu_custom_call.1} parent=1 // pred_region
      %s84 = sld [smem:[#allocation3]]
      %s86 = ssub.s32 256, 256
      %87 = vsyncadd [#allocation14], %s86
      %s88 = smul.addr %s84, 4
      %s89 = smul.addr %s88, 64
      %s90 = scalar_lea.hbm %s8, %s89
      %s92 = sshll.u32 [#allocation13], 4
      %s93 = int_to_ptr.vmem [resolvable:$true] %s92
      %95 = dma.hbm_to_vmem [thread:$0]  %s90, 256, %s93, [#allocation14]
    $region33: #{tpu_custom_call.1} parent=1 // pred_fallthru
      _
    // Predicated region
    $region34: #{tpu_custom_call.1} parent=1 // pred_check
      _
    $region35: #{tpu_custom_call.1} parent=1 // pred_check_branch
      %97 = sbr.rel (0) target = $region37
    $region36: #{tpu_custom_call.1} parent=1 // pred_region
      %s98 = sld [smem:[#allocation3]]
      %s100 = ssub.s32 32, 32
      %101 = vsyncadd [#allocation14], %s100
      %s102 = smul.addr %s98, 32
      %s103 = scalar_lea.hbm %s9, %s102
      %s105 = sshll.u32 [#allocation15], 4
      %s106 = int_to_ptr.vmem [resolvable:$true] %s105
      %108 = dma.hbm_to_vmem [thread:$0]  %s103, 32, %s106, [#allocation14]
    $region37: #{tpu_custom_call.1} parent=1 // pred_fallthru
      _
    // Predicated region
    $region38: #{tpu_custom_call.1} parent=1 // pred_check
      _
    $region39: #{tpu_custom_call.1} parent=1 // pred_check_branch
      %110 = sbr.rel (0) target = $region41
    $region40: #{tpu_custom_call.1} parent=1 // pred_region
      %111 = dma.done [#allocation5], 128
    $region41: #{tpu_custom_call.1} parent=1 // pred_fallthru
      _
    // Predicated region
    $region42: #{tpu_custom_call.1} parent=1 // pred_check
      _
    $region43: #{tpu_custom_call.1} parent=1 // pred_check_branch
      %113 = sbr.rel (0) target = $region45
    $region44: #{tpu_custom_call.1} parent=1 // pred_region
      %114 = dma.done [#allocation8], 128
    $region45: #{tpu_custom_call.1} parent=1 // pred_fallthru
      _
    // Predicated region
    $region46: #{tpu_custom_call.1} parent=1 // pred_check
      _
    $region47: #{tpu_custom_call.1} parent=1 // pred_check_branch
      %116 = sbr.rel (0) target = $region49
    $region48: #{tpu_custom_call.1} parent=1 // pred_region
      %117 = dma.done [#allocation8], 128
    $region49: #{tpu_custom_call.1} parent=1 // pred_fallthru
      _
    // Predicated region
    $region50: #{tpu_custom_call.1} parent=1 // pred_check
      _
    $region51: #{tpu_custom_call.1} parent=1 // pred_check_branch
      %119 = sbr.rel (0) target = $region53
    $region52: #{tpu_custom_call.1} parent=1 // pred_region
      %120 = dma.done [#allocation11], 512
    $region53: #{tpu_custom_call.1} parent=1 // pred_fallthru
      _
    // Predicated region
    $region54: #{tpu_custom_call.1} parent=1 // pred_check
      _
    $region55: #{tpu_custom_call.1} parent=1 // pred_check_branch
      %122 = sbr.rel (0) target = $region57
    $region56: #{tpu_custom_call.1} parent=1 // pred_region
      %123 = dma.done [#allocation11], 4096
    $region57: #{tpu_custom_call.1} parent=1 // pred_fallthru
      _
    // Predicated region
    $region58: #{tpu_custom_call.1} parent=1 // pred_check
      _
    $region59: #{tpu_custom_call.1} parent=1 // pred_check_branch
      %125 = sbr.rel (0) target = $region61
    $region60: #{tpu_custom_call.1} parent=1 // pred_region
      %126 = dma.done [#allocation14], 256
    $region61: #{tpu_custom_call.1} parent=1 // pred_fallthru
      _
    // Predicated region
    $region62: #{tpu_custom_call.1} parent=1 // pred_check
      _
    $region63: #{tpu_custom_call.1} parent=1 // pred_check_branch
      %128 = sbr.rel (0) target = $region65
    $region64: #{tpu_custom_call.1} parent=1 // pred_region
      %129 = dma.done [#allocation14], 32
    $region65: #{tpu_custom_call.1} parent=1 // pred_fallthru
      _
    %s130 = sld [smem:[#allocation3]]
    %s131 = sld [smem:[#allocation3]]
    %v133 = vld [vmem:[#allocation7] sm:$0xff]
    %v134 = vpack.c.bf16 %v133, %v133
    %v135 = vld [vmem:[#allocation12] sm:$0xff]
    %v136 = vld [vmem:[#allocation12 + $0x8] sm:$0xff]
    %v137 = vld [vmem:[#allocation12 + $0x10] sm:$0xff]
    %v138 = vld [vmem:[#allocation12 + $0x18] sm:$0xff]
    %v139 = vld [vmem:[#allocation12 + $0x20] sm:$0xff]
    %v140 = vld [vmem:[#allocation12 + $0x28] sm:$0xff]
    %v141 = vld [vmem:[#allocation12 + $0x30] sm:$0xff]
    %v142 = vld [vmem:[#allocation12 + $0x38] sm:$0xff]
    %v143 = vld [vmem:[#allocation12 + $0x40] sm:$0xff]
    %v144 = vld [vmem:[#allocation12 + $0x48] sm:$0xff]
    %v145 = vld [vmem:[#allocation12 + $0x50] sm:$0xff]
    %v146 = vld [vmem:[#allocation12 + $0x58] sm:$0xff]
    %v147 = vld [vmem:[#allocation12 + $0x60] sm:$0xff]
    %v148 = vld [vmem:[#allocation12 + $0x68] sm:$0xff]
    %v149 = vld [vmem:[#allocation12 + $0x70] sm:$0xff]
    %v150 = vld [vmem:[#allocation12 + $0x78] sm:$0xff]
    %v151 = vld [vmem:[#allocation12 + $0x80] sm:$0xff]
    %v152 = vld [vmem:[#allocation12 + $0x88] sm:$0xff]
    %v153 = vld [vmem:[#allocation12 + $0x90] sm:$0xff]
    %v154 = vld [vmem:[#allocation12 + $0x98] sm:$0xff]
    %v155 = vld [vmem:[#allocation12 + $0xa0] sm:$0xff]
    %v156 = vld [vmem:[#allocation12 + $0xa8] sm:$0xff]
    %v157 = vld [vmem:[#allocation12 + $0xb0] sm:$0xff]
    %v158 = vld [vmem:[#allocation12 + $0xb8] sm:$0xff]
    %v159 = vld [vmem:[#allocation12 + $0xc0] sm:$0xff]
    %v160 = vld [vmem:[#allocation12 + $0xc8] sm:$0xff]
    %v161 = vld [vmem:[#allocation12 + $0xd0] sm:$0xff]
    %v162 = vld [vmem:[#allocation12 + $0xd8] sm:$0xff]
    %v163 = vld [vmem:[#allocation12 + $0xe0] sm:$0xff]
    %v164 = vld [vmem:[#allocation12 + $0xe8] sm:$0xff]
    %v165 = vld [vmem:[#allocation12 + $0xf0] sm:$0xff]
    %v166 = vld [vmem:[#allocation12 + $0xf8] sm:$0xff]
    %v199 = vunpack.c.l.b16 %v135
    %v200 = vunpack.c.h.b16 %v135
    %v201 = vunpack.c.l.b16 %v136
    %v202 = vunpack.c.h.b16 %v136
    %v203 = vunpack.c.l.b16 %v137
    %v204 = vunpack.c.h.b16 %v137
    %v205 = vunpack.c.l.b16 %v138
    %v206 = vunpack.c.h.b16 %v138
    %v207 = vunpack.c.l.b16 %v139
    %v208 = vunpack.c.h.b16 %v139
    %v209 = vunpack.c.l.b16 %v140
    %v210 = vunpack.c.h.b16 %v140
    %v211 = vunpack.c.l.b16 %v141
    %v212 = vunpack.c.h.b16 %v141
    %v213 = vunpack.c.l.b16 %v142
    %v214 = vunpack.c.h.b16 %v142
    %v215 = vunpack.c.l.b16 %v143
    %v216 = vunpack.c.h.b16 %v143
    %v217 = vunpack.c.l.b16 %v144
    %v218 = vunpack.c.h.b16 %v144
    %v219 = vunpack.c.l.b16 %v145
    %v220 = vunpack.c.h.b16 %v145
    %v221 = vunpack.c.l.b16 %v146
    %v222 = vunpack.c.h.b16 %v146
    %v223 = vunpack.c.l.b16 %v147
    %v224 = vunpack.c.h.b16 %v147
    %v225 = vunpack.c.l.b16 %v148
    %v226 = vunpack.c.h.b16 %v148
    %v227 = vunpack.c.l.b16 %v149
    %v228 = vunpack.c.h.b16 %v149
    %v229 = vunpack.c.l.b16 %v150
    %v230 = vunpack.c.h.b16 %v150
    %v231 = vunpack.c.l.b16 %v151
    %v232 = vunpack.c.h.b16 %v151
    %v233 = vunpack.c.l.b16 %v152
    %v234 = vunpack.c.h.b16 %v152
    %v235 = vunpack.c.l.b16 %v153
    %v236 = vunpack.c.h.b16 %v153
    %v237 = vunpack.c.l.b16 %v154
    %v238 = vunpack.c.h.b16 %v154
    %v239 = vunpack.c.l.b16 %v155
    %v240 = vunpack.c.h.b16 %v155
    %v241 = vunpack.c.l.b16 %v156
    %v242 = vunpack.c.h.b16 %v156
    %v243 = vunpack.c.l.b16 %v157
    %v244 = vunpack.c.h.b16 %v157
    %v245 = vunpack.c.l.b16 %v158
    %v246 = vunpack.c.h.b16 %v158
    %v247 = vunpack.c.l.b16 %v159
    %v248 = vunpack.c.h.b16 %v159
    %v249 = vunpack.c.l.b16 %v160
    %v250 = vunpack.c.h.b16 %v160
    %v251 = vunpack.c.l.b16 %v161
    %v252 = vunpack.c.h.b16 %v161
    %v253 = vunpack.c.l.b16 %v162
    %v254 = vunpack.c.h.b16 %v162
    %v255 = vunpack.c.l.b16 %v163
    %v256 = vunpack.c.h.b16 %v163
    %v257 = vunpack.c.l.b16 %v164
    %v258 = vunpack.c.h.b16 %v164
    %v259 = vunpack.c.l.b16 %v165
    %v260 = vunpack.c.h.b16 %v165
    %v261 = vunpack.c.l.b16 %v166
    %v262 = vunpack.c.h.b16 %v166
    %v263 = vpack.c.b16 %v203, %v199
    %v264 = vpack.c.b16 %v204, %v200
    %v265 = vpack.c.b16 %v205, %v201
    %v266 = vpack.c.b16 %v206, %v202
    %v267 = vpack.c.b16 %v211, %v207
    %v268 = vpack.c.b16 %v212, %v208
    %v269 = vpack.c.b16 %v213, %v209
    %v270 = vpack.c.b16 %v214, %v210
    %v271 = vpack.c.b16 %v219, %v215
    %v272 = vpack.c.b16 %v220, %v216
    %v273 = vpack.c.b16 %v221, %v217
    %v274 = vpack.c.b16 %v222, %v218
    %v275 = vpack.c.b16 %v227, %v223
    %v276 = vpack.c.b16 %v228, %v224
    %v277 = vpack.c.b16 %v229, %v225
    %v278 = vpack.c.b16 %v230, %v226
    %v279 = vpack.c.b16 %v235, %v231
    %v280 = vpack.c.b16 %v236, %v232
    %v281 = vpack.c.b16 %v237, %v233
    %v282 = vpack.c.b16 %v238, %v234
    %v283 = vpack.c.b16 %v243, %v239
    %v284 = vpack.c.b16 %v244, %v240
    %v285 = vpack.c.b16 %v245, %v241
    %v286 = vpack.c.b16 %v246, %v242
    %v287 = vpack.c.b16 %v251, %v247
    %v288 = vpack.c.b16 %v252, %v248
    %v289 = vpack.c.b16 %v253, %v249
    %v290 = vpack.c.b16 %v254, %v250
    %v291 = vpack.c.b16 %v259, %v255
    %v292 = vpack.c.b16 %v260, %v256
    %v293 = vpack.c.b16 %v261, %v257
    %v294 = vpack.c.b16 %v262, %v258
    %327 = vmatprep.subr.bf16.mxu0 %v264
    %328 = vmatpush1.bf16.msra.mxu0 %v263
    %329 = vmatprep.subr.bf16.mxu0 %v268
    %330 = vmatpush1.bf16.msra.mxu0 %v267
    %331 = vmatprep.subr.bf16.mxu0 %v272
    %332 = vmatpush1.bf16.msra.mxu0 %v271
    %333 = vmatprep.subr.bf16.mxu0 %v276
    %334 = vmatpush1.bf16.msra.mxu0 %v275
    %335 = vmatprep.subr.bf16.mxu0 %v280
    %336 = vmatpush1.bf16.msra.mxu0 %v279
    %337 = vmatprep.subr.bf16.mxu0 %v284
    %338 = vmatpush1.bf16.msra.mxu0 %v283
    %339 = vmatprep.subr.bf16.mxu0 %v288
    %340 = vmatpush1.bf16.msra.mxu0 %v287
    %341 = vmatprep.subr.bf16.mxu0 %v292
    %342 = vmatpush1.bf16.msra.mxu0 %v291
    %343 = vmatprep.subr.bf16.mxu0 0
    %344 = vmatpush1.bf16.msra.mxu0 0
    %345 = vmatprep.subr.bf16.mxu0 0
    %346 = vmatpush1.bf16.msra.mxu0 0
    %347 = vmatprep.subr.bf16.mxu0 0
    %348 = vmatpush1.bf16.msra.mxu0 0
    %349 = vmatprep.subr.bf16.mxu0 0
    %350 = vmatpush1.bf16.msra.mxu0 0
    %351 = vmatprep.subr.bf16.mxu0 0
    %352 = vmatpush1.bf16.msra.mxu0 0
    %353 = vmatprep.subr.bf16.mxu0 0
    %354 = vmatpush1.bf16.msra.mxu0 0
    %355 = vmatprep.subr.bf16.mxu0 0
    %356 = vmatpush1.bf16.msra.mxu0 0
    %357 = vmatprep.subr.bf16.mxu0 0
    %358 = vmatpush1.bf16.msra.mxu0 0
    %359 = vmatprep.mubr.bf16.mxu0 0
    %360 = vmatmul.mubr.bf16.gmra.mrb[0].mxu0 %v134
    %v361 = vpop.f32.mrb[0].mxu0
    %v362 = vadd.f32 0.0, %v361
    %v363 = vpop.f32.mrb[0].mxu0
    %v364 = vadd.f32 0.0, %v363
    %v365 = vpop.f32.mrb[0].mxu0
    %v366 = vpop.f32.mrb[0].mxu0
    %367 = vdwg.mxu0
    %368 = vmatprep.subr.bf16.mxu0 %v266
    %369 = vmatpush1.bf16.msra.mxu0 %v265
    %370 = vmatprep.subr.bf16.mxu0 %v270
    %371 = vmatpush1.bf16.msra.mxu0 %v269
    %372 = vmatprep.subr.bf16.mxu0 %v274
    %373 = vmatpush1.bf16.msra.mxu0 %v273
    %374 = vmatprep.subr.bf16.mxu0 %v278
    %375 = vmatpush1.bf16.msra.mxu0 %v277
    %376 = vmatprep.subr.bf16.mxu0 %v282
    %377 = vmatpush1.bf16.msra.mxu0 %v281
    %378 = vmatprep.subr.bf16.mxu0 %v286
    %379 = vmatpush1.bf16.msra.mxu0 %v285
    %380 = vmatprep.subr.bf16.mxu0 %v290
    %381 = vmatpush1.bf16.msra.mxu0 %v289
    %382 = vmatprep.subr.bf16.mxu0 %v294
    %383 = vmatpush1.bf16.msra.mxu0 %v293
    %384 = vmatprep.subr.bf16.mxu0 0
    %385 = vmatpush1.bf16.msra.mxu0 0
    %386 = vmatprep.subr.bf16.mxu0 0
    %387 = vmatpush1.bf16.msra.mxu0 0
    %388 = vmatprep.subr.bf16.mxu0 0
    %389 = vmatpush1.bf16.msra.mxu0 0
    %390 = vmatprep.subr.bf16.mxu0 0
    %391 = vmatpush1.bf16.msra.mxu0 0
    %392 = vmatprep.subr.bf16.mxu0 0
    %393 = vmatpush1.bf16.msra.mxu0 0
    %394 = vmatprep.subr.bf16.mxu0 0
    %395 = vmatpush1.bf16.msra.mxu0 0
    %396 = vmatprep.subr.bf16.mxu0 0
    %397 = vmatpush1.bf16.msra.mxu0 0
    %398 = vmatprep.subr.bf16.mxu0 0
    %399 = vmatpush1.bf16.msra.mxu0 0
    %400 = vmatprep.mubr.bf16.mxu0 0
    %401 = vmatmul.mubr.bf16.gmra.mrb[0].mxu0 %v134
    %v402 = vpop.f32.mrb[0].mxu0
    %v403 = vadd.f32 0.0, %v402
    %v404 = vpop.f32.mrb[0].mxu0
    %v405 = vadd.f32 0.0, %v404
    %v406 = vpop.f32.mrb[0].mxu0
    %v407 = vpop.f32.mrb[0].mxu0
    %408 = vdwg.mxu0
    %v409 = vld [vmem:[#allocation4] sm:$0xff]
    %v410 = vpack.c.bf16 %v409, %v409
    %v411 = vld [vmem:[#allocation10] sm:$0xff]
    %v412 = vld [vmem:[#allocation10 + $0x8] sm:$0xff]
    %v413 = vld [vmem:[#allocation10 + $0x10] sm:$0xff]
    %v414 = vld [vmem:[#allocation10 + $0x18] sm:$0xff]
    %v419 = vunpack.c.l.b16 %v411
    %v420 = vunpack.c.h.b16 %v411
    %v421 = vunpack.c.l.b16 %v412
    %v422 = vunpack.c.h.b16 %v412
    %v423 = vunpack.c.l.b16 %v413
    %v424 = vunpack.c.h.b16 %v413
    %v425 = vunpack.c.l.b16 %v414
    %v426 = vunpack.c.h.b16 %v414
    %v427 = vpack.c.b16 %v423, %v419
    %v428 = vpack.c.b16 %v424, %v420
    %v429 = vpack.c.b16 %v425, %v421
    %v430 = vpack.c.b16 %v426, %v422
    %vm435 = vcmask 130048
    %v437 = vsel %vm435, %v410, 0
    %439 = vmatprep.subr.bf16.mxu0 %v428
    %440 = vmatpush1.bf16.msra.mxu0 %v427
    %441 = vmatprep.subr.bf16.mxu0 0
    %442 = vmatpush1.bf16.msra.mxu0 0
    %443 = vmatprep.subr.bf16.mxu0 0
    %444 = vmatpush1.bf16.msra.mxu0 0
    %445 = vmatprep.subr.bf16.mxu0 0
    %446 = vmatpush1.bf16.msra.mxu0 0
    %447 = vmatprep.subr.bf16.mxu0 0
    %448 = vmatpush1.bf16.msra.mxu0 0
    %449 = vmatprep.subr.bf16.mxu0 0
    %450 = vmatpush1.bf16.msra.mxu0 0
    %451 = vmatprep.subr.bf16.mxu0 0
    %452 = vmatpush1.bf16.msra.mxu0 0
    %453 = vmatprep.subr.bf16.mxu0 0
    %454 = vmatpush1.bf16.msra.mxu0 0
    %455 = vmatprep.subr.bf16.mxu0 0
    %456 = vmatpush1.bf16.msra.mxu0 0
    %457 = vmatprep.subr.bf16.mxu0 0
    %458 = vmatpush1.bf16.msra.mxu0 0
    %459 = vmatprep.subr.bf16.mxu0 0
    %460 = vmatpush1.bf16.msra.mxu0 0
    %461 = vmatprep.subr.bf16.mxu0 0
    %462 = vmatpush1.bf16.msra.mxu0 0
    %463 = vmatprep.subr.bf16.mxu0 0
    %464 = vmatpush1.bf16.msra.mxu0 0
    %465 = vmatprep.subr.bf16.mxu0 0
    %466 = vmatpush1.bf16.msra.mxu0 0
    %467 = vmatprep.subr.bf16.mxu0 0
    %468 = vmatpush1.bf16.msra.mxu0 0
    %469 = vmatprep.subr.bf16.mxu0 0
    %470 = vmatpush1.bf16.msra.mxu0 0
    %471 = vmatprep.mubr.bf16.mxu0 0
    %472 = vmatmul.mubr.bf16.gmra.mrb[0].mxu0 %v437
    %v473 = vpop.f32.mrb[0].mxu0
    %v474 = vadd.f32 0.0, %v473
    %v475 = vpop.f32.mrb[0].mxu0
    %v476 = vadd.f32 0.0, %v475
    %v477 = vpop.f32.mrb[0].mxu0
    %v478 = vpop.f32.mrb[0].mxu0
    %479 = vdwg.mxu0
    %480 = vmatprep.subr.bf16.mxu0 %v430
    %481 = vmatpush1.bf16.msra.mxu0 %v429
    %482 = vmatprep.subr.bf16.mxu0 0
    %483 = vmatpush1.bf16.msra.mxu0 0
    %484 = vmatprep.subr.bf16.mxu0 0
    %485 = vmatpush1.bf16.msra.mxu0 0
    %486 = vmatprep.subr.bf16.mxu0 0
    %487 = vmatpush1.bf16.msra.mxu0 0
    %488 = vmatprep.subr.bf16.mxu0 0
    %489 = vmatpush1.bf16.msra.mxu0 0
    %490 = vmatprep.subr.bf16.mxu0 0
    %491 = vmatpush1.bf16.msra.mxu0 0
    %492 = vmatprep.subr.bf16.mxu0 0
    %493 = vmatpush1.bf16.msra.mxu0 0
    %494 = vmatprep.subr.bf16.mxu0 0
    %495 = vmatpush1.bf16.msra.mxu0 0
    %496 = vmatprep.subr.bf16.mxu0 0
    %497 = vmatpush1.bf16.msra.mxu0 0
    %498 = vmatprep.subr.bf16.mxu0 0
    %499 = vmatpush1.bf16.msra.mxu0 0
    %500 = vmatprep.subr.bf16.mxu0 0
    %501 = vmatpush1.bf16.msra.mxu0 0
    %502 = vmatprep.subr.bf16.mxu0 0
    %503 = vmatpush1.bf16.msra.mxu0 0
    %504 = vmatprep.subr.bf16.mxu0 0
    %505 = vmatpush1.bf16.msra.mxu0 0
    %506 = vmatprep.subr.bf16.mxu0 0
    %507 = vmatpush1.bf16.msra.mxu0 0
    %508 = vmatprep.subr.bf16.mxu0 0
    %509 = vmatpush1.bf16.msra.mxu0 0
    %510 = vmatprep.subr.bf16.mxu0 0
    %511 = vmatpush1.bf16.msra.mxu0 0
    %512 = vmatprep.mubr.bf16.mxu0 0
    %513 = vmatmul.mubr.bf16.gmra.mrb[0].mxu0 %v437
    %v514 = vpop.f32.mrb[0].mxu0
    %v515 = vadd.f32 0.0, %v514
    %v516 = vpop.f32.mrb[0].mxu0
    %v517 = vadd.f32 0.0, %v516
    %v518 = vpop.f32.mrb[0].mxu0
    %v519 = vpop.f32.mrb[0].mxu0
    %520 = vdwg.mxu0
    %v521 = vld [vmem:[%s6] sm:$0x77]
    %v522 = vld [vmem:[%s6 + $0x8] sm:$0x77]
    %v523 = vld [vmem:[#allocation13] sm:$0xff]
    %v524 = vld [vmem:[#allocation13 + $0x8] sm:$0xff]
    %v525 = vrot.slane %v362, 4
    %v526 = vadd.f32 %v362, %v525
    %v527 = vrot.slane %v526, 2
    %v528 = vadd.f32 %v526, %v527
    %v529 = vrot.slane %v528, 1
    %v530 = vadd.f32 %v528, %v529
    %v531 = vrot.slane %v364, 4
    %v532 = vadd.f32 %v364, %v531
    %v533 = vrot.slane %v532, 2
    %v534 = vadd.f32 %v532, %v533
    %v535 = vrot.slane %v534, 1
    %v536 = vadd.f32 %v534, %v535
    %v537 = vrot.slane %v403, 4
    %v538 = vadd.f32 %v403, %v537
    %v539 = vrot.slane %v538, 2
    %v540 = vadd.f32 %v538, %v539
    %v541 = vrot.slane %v540, 1
    %v542 = vadd.f32 %v540, %v541
    %v543 = vrot.slane %v405, 4
    %v544 = vadd.f32 %v405, %v543
    %v545 = vrot.slane %v544, 2
    %v546 = vadd.f32 %v544, %v545
    %v547 = vrot.slane %v546, 1
    %v548 = vadd.f32 %v546, %v547
    %v549 = vmul.f32 %v530, 0.125
    %v550 = vmul.f32 %v536, 0.125
    %v551 = vmul.f32 %v542, 0.125
    %v552 = vmul.f32 %v548, 0.125
    %v553 = vsub.f32 %v362, %v549
    %v554 = vsub.f32 %v364, %v550
    %v555 = vsub.f32 %v403, %v551
    %v556 = vsub.f32 %v405, %v552
    %v557 = vmul.f32 %v553, %v553
    %v558 = vmul.f32 %v554, %v554
    %v559 = vmul.f32 %v555, %v555
    %v560 = vmul.f32 %v556, %v556
    %v561 = vrot.slane %v557, 4
    %v562 = vadd.f32 %v557, %v561
    %v563 = vrot.slane %v562, 2
    %v564 = vadd.f32 %v562, %v563
    %v565 = vrot.slane %v564, 1
    %v566 = vadd.f32 %v564, %v565
    %v567 = vrot.slane %v558, 4
    %v568 = vadd.f32 %v558, %v567
    %v569 = vrot.slane %v568, 2
    %v570 = vadd.f32 %v568, %v569
    %v571 = vrot.slane %v570, 1
    %v572 = vadd.f32 %v570, %v571
    %v573 = vrot.slane %v559, 4
    %v574 = vadd.f32 %v559, %v573
    %v575 = vrot.slane %v574, 2
    %v576 = vadd.f32 %v574, %v575
    %v577 = vrot.slane %v576, 1
    %v578 = vadd.f32 %v576, %v577
    %v579 = vrot.slane %v560, 4
    %v580 = vadd.f32 %v560, %v579
    %v581 = vrot.slane %v580, 2
    %v582 = vadd.f32 %v580, %v581
    %v583 = vrot.slane %v582, 1
    %v584 = vadd.f32 %v582, %v583
    %v585 = vmul.f32 %v566, 0.14285715
    %v586 = vmul.f32 %v572, 0.14285715
    %v587 = vmul.f32 %v578, 0.14285715
    %v588 = vmul.f32 %v584, 0.14285715
    %v589 = vmul.f32 %v549, 0.9
    %v590 = vmul.f32 %v550, 0.9
    %v591 = vmul.f32 %v551, 0.9
    %v592 = vmul.f32 %v552, 0.9
    %v593 = vmul.f32 %v523, 0.1
    %v594 = vmul.f32 %v524, 0.1
    %v597 = vlaneseq
    %v598 = vshrl.u32 %v597, 7
    %v599 = vsub.s32 0, %v598
    %v600 = vrot.slane %v593, %v599
    %v601 = vlaneseq
    %v602 = vshrl.u32 %v601, 7
    %v603 = vsub.s32 4, %v602
    %v604 = vrot.slane %v593, %v603
    %v605 = vlaneseq
    %v606 = vshrl.u32 %v605, 7
    %v607 = vsub.s32 0, %v606
    %v608 = vrot.slane %v594, %v607
    %v609 = vlaneseq
    %v610 = vshrl.u32 %v609, 7
    %v611 = vsub.s32 4, %v610
    %v612 = vrot.slane %v594, %v611
    %v617 = vadd.f32 %v589, %v600
    %v618 = vadd.f32 %v590, %v604
    %v619 = vadd.f32 %v591, %v608
    %v620 = vadd.f32 %v592, %v612
    %v621 = vmul.f32 %v585, 0.9
    %v622 = vmul.f32 %v586, 0.9
    %v623 = vmul.f32 %v587, 0.9
    %v624 = vmul.f32 %v588, 0.9
    %v625 = vlaneseq
    %v626 = vshrl.u32 %v625, 7
    %v627 = vsub.s32 1, %v626
    %v628 = vrot.slane %v593, %v627
    %v629 = vlaneseq
    %v630 = vshrl.u32 %v629, 7
    %v631 = vsub.s32 5, %v630
    %v632 = vrot.slane %v593, %v631
    %v633 = vlaneseq
    %v634 = vshrl.u32 %v633, 7
    %v635 = vsub.s32 1, %v634
    %v636 = vrot.slane %v594, %v635
    %v637 = vlaneseq
    %v638 = vshrl.u32 %v637, 7
    %v639 = vsub.s32 5, %v638
    %v640 = vrot.slane %v594, %v639
    %v645 = vadd.f32 %v621, %v628
    %v646 = vadd.f32 %v622, %v632
    %v647 = vadd.f32 %v623, %v636
    %v648 = vadd.f32 %v624, %v640
    %v649 = vadd.f32 %v645, 1e-05
    %v650 = vadd.f32 %v646, 1e-05
    %v651 = vadd.f32 %v647, 1e-05
    %v652 = vadd.f32 %v648, 1e-05
    %v653 = vrcp.pop %v649
    %v654 = vrcp.pop %v650
    %v655 = vrcp.pop %v651
    %v656 = vrcp.pop %v652
    %v661 = vcombine.low %v653, %v654
    %v662 = vcombine.low %v655, %v656
    %v663 = vrot.slane %v661, 7
    %v664 = vrot.slane %v662, 7
    %v667 = vmul.f32 %v521, %v663
    %v668 = vmul.f32 %v522, %v664
    %v669 = vsub.f32 0.0, %v617
    %v670 = vsub.f32 0.0, %v618
    %v671 = vsub.f32 0.0, %v619
    %v672 = vsub.f32 0.0, %v620
    %v675 = vlaneseq
    %v676 = vshrl.u32 %v675, 7
    %v677 = vsub.s32 1, %v676
    %v678 = vrot.slane %v667, %v677
    %v679 = vlaneseq
    %v680 = vshrl.u32 %v679, 7
    %v681 = vsub.s32 5, %v680
    %v682 = vrot.slane %v667, %v681
    %v683 = vlaneseq
    %v684 = vshrl.u32 %v683, 7
    %v685 = vsub.s32 1, %v684
    %v686 = vrot.slane %v668, %v685
    %v687 = vlaneseq
    %v688 = vshrl.u32 %v687, 7
    %v689 = vsub.s32 5, %v688
    %v690 = vrot.slane %v668, %v689
    %v695 = vmul.f32 %v669, %v678
    %v696 = vmul.f32 %v670, %v682
    %v697 = vmul.f32 %v671, %v686
    %v698 = vmul.f32 %v672, %v690
    %v699 = vrot.slane %v474, 4
    %v700 = vadd.f32 %v474, %v699
    %v701 = vrot.slane %v700, 2
    %v702 = vadd.f32 %v700, %v701
    %v703 = vrot.slane %v702, 1
    %v704 = vadd.f32 %v702, %v703
    %v705 = vrot.slane %v476, 4
    %v706 = vadd.f32 %v476, %v705
    %v707 = vrot.slane %v706, 2
    %v708 = vadd.f32 %v706, %v707
    %v709 = vrot.slane %v708, 1
    %v710 = vadd.f32 %v708, %v709
    %v711 = vrot.slane %v515, 4
    %v712 = vadd.f32 %v515, %v711
    %v713 = vrot.slane %v712, 2
    %v714 = vadd.f32 %v712, %v713
    %v715 = vrot.slane %v714, 1
    %v716 = vadd.f32 %v714, %v715
    %v717 = vrot.slane %v517, 4
    %v718 = vadd.f32 %v517, %v717
    %v719 = vrot.slane %v718, 2
    %v720 = vadd.f32 %v718, %v719
    %v721 = vrot.slane %v720, 1
    %v722 = vadd.f32 %v720, %v721
    %v723 = vmul.f32 %v704, 0.125
    %v724 = vmul.f32 %v710, 0.125
    %v725 = vmul.f32 %v716, 0.125
    %v726 = vmul.f32 %v722, 0.125
    %v727 = vsub.f32 %v474, %v723
    %v728 = vsub.f32 %v476, %v724
    %v729 = vsub.f32 %v515, %v725
    %v730 = vsub.f32 %v517, %v726
    %v731 = vmul.f32 %v727, %v727
    %v732 = vmul.f32 %v728, %v728
    %v733 = vmul.f32 %v729, %v729
    %v734 = vmul.f32 %v730, %v730
    %v735 = vrot.slane %v731, 4
    %v736 = vadd.f32 %v731, %v735
    %v737 = vrot.slane %v736, 2
    %v738 = vadd.f32 %v736, %v737
    %v739 = vrot.slane %v738, 1
    %v740 = vadd.f32 %v738, %v739
    %v741 = vrot.slane %v732, 4
    %v742 = vadd.f32 %v732, %v741
    %v743 = vrot.slane %v742, 2
    %v744 = vadd.f32 %v742, %v743
    %v745 = vrot.slane %v744, 1
    %v746 = vadd.f32 %v744, %v745
    %v747 = vrot.slane %v733, 4
    %v748 = vadd.f32 %v733, %v747
    %v749 = vrot.slane %v748, 2
    %v750 = vadd.f32 %v748, %v749
    %v751 = vrot.slane %v750, 1
    %v752 = vadd.f32 %v750, %v751
    %v753 = vrot.slane %v734, 4
    %v754 = vadd.f32 %v734, %v753
    %v755 = vrot.slane %v754, 2
    %v756 = vadd.f32 %v754, %v755
    %v757 = vrot.slane %v756, 1
    %v758 = vadd.f32 %v756, %v757
    %v759 = vmul.f32 %v740, 0.14285715
    %v760 = vmul.f32 %v746, 0.14285715
    %v761 = vmul.f32 %v752, 0.14285715
    %v762 = vmul.f32 %v758, 0.14285715
    %v763 = vmul.f32 %v723, 0.9
    %v764 = vmul.f32 %v724, 0.9
    %v765 = vmul.f32 %v725, 0.9
    %v766 = vmul.f32 %v726, 0.9
    %v767 = vlaneseq
    %v768 = vshrl.u32 %v767, 7
    %v769 = vsub.s32 2, %v768
    %v770 = vrot.slane %v593, %v769
    %v771 = vlaneseq
    %v772 = vshrl.u32 %v771, 7
    %v773 = vsub.s32 6, %v772
    %v774 = vrot.slane %v593, %v773
    %v775 = vlaneseq
    %v776 = vshrl.u32 %v775, 7
    %v777 = vsub.s32 2, %v776
    %v778 = vrot.slane %v594, %v777
    %v779 = vlaneseq
    %v780 = vshrl.u32 %v779, 7
    %v781 = vsub.s32 6, %v780
    %v782 = vrot.slane %v594, %v781
    %v787 = vadd.f32 %v763, %v770
    %v788 = vadd.f32 %v764, %v774
    %v789 = vadd.f32 %v765, %v778
    %v790 = vadd.f32 %v766, %v782
    %v791 = vmul.f32 %v759, 0.9
    %v792 = vmul.f32 %v760, 0.9
    %v793 = vmul.f32 %v761, 0.9
    %v794 = vmul.f32 %v762, 0.9
    %v795 = vlaneseq
    %v796 = vshrl.u32 %v795, 7
    %v797 = vsub.s32 3, %v796
    %v798 = vrot.slane %v593, %v797
    %v799 = vlaneseq
    %v800 = vshrl.u32 %v799, 7
    %v801 = vsub.s32 7, %v800
    %v802 = vrot.slane %v593, %v801
    %v803 = vlaneseq
    %v804 = vshrl.u32 %v803, 7
    %v805 = vsub.s32 3, %v804
    %v806 = vrot.slane %v594, %v805
    %v807 = vlaneseq
    %v808 = vshrl.u32 %v807, 7
    %v809 = vsub.s32 7, %v808
    %v810 = vrot.slane %v594, %v809
    %v815 = vadd.f32 %v791, %v798
    %v816 = vadd.f32 %v792, %v802
    %v817 = vadd.f32 %v793, %v806
    %v818 = vadd.f32 %v794, %v810
    %v819 = vadd.f32 %v815, 1e-05
    %v820 = vadd.f32 %v816, 1e-05
    %v821 = vadd.f32 %v817, 1e-05
    %v822 = vadd.f32 %v818, 1e-05
    %v823 = vrcp.pop %v819
    %v824 = vrcp.pop %v820
    %v825 = vrcp.pop %v821
    %v826 = vrcp.pop %v822
    %v831 = vcombine.low %v823, %v824
    %v832 = vcombine.low %v825, %v826
    %v833 = vrot.slane %v831, 6
    %v834 = vrot.slane %v832, 6
    %v837 = vmul.f32 %v521, %v833
    %v838 = vmul.f32 %v522, %v834
    %v839 = vsub.f32 0.0, %v787
    %v840 = vsub.f32 0.0, %v788
    %v841 = vsub.f32 0.0, %v789
    %v842 = vsub.f32 0.0, %v790
    %v845 = vlaneseq
    %v846 = vshrl.u32 %v845, 7
    %v847 = vsub.s32 2, %v846
    %v848 = vrot.slane %v837, %v847
    %v849 = vlaneseq
    %v850 = vshrl.u32 %v849, 7
    %v851 = vsub.s32 6, %v850
    %v852 = vrot.slane %v837, %v851
    %v853 = vlaneseq
    %v854 = vshrl.u32 %v853, 7
    %v855 = vsub.s32 2, %v854
    %v856 = vrot.slane %v838, %v855
    %v857 = vlaneseq
    %v858 = vshrl.u32 %v857, 7
    %v859 = vsub.s32 6, %v858
    %v860 = vrot.slane %v838, %v859
    %v865 = vmul.f32 %v839, %v848
    %v866 = vmul.f32 %v840, %v852
    %v867 = vmul.f32 %v841, %v856
    %v868 = vmul.f32 %v842, %v860
    %v869 = vlaneseq
    %v870 = vshrl.u32 %v869, 7
    %v871 = vsub.s32 1, %v870
    %v872 = vrot.slane %v678, %v871
    %v873 = vlaneseq
    %v874 = vshrl.u32 %v873, 7
    %v875 = vsub.s32 1, %v874
    %v876 = vrot.slane %v682, %v875
    %v877 = vlaneseq
    %v878 = vshrl.u32 %v877, 7
    %v879 = vsub.s32 1, %v878
    %v880 = vrot.slane %v686, %v879
    %v881 = vlaneseq
    %v882 = vshrl.u32 %v881, 7
    %v883 = vsub.s32 1, %v882
    %v884 = vrot.slane %v690, %v883
    %v885 = vmul.f32 %v362, %v872
    %v886 = vmul.f32 %v364, %v876
    %v887 = vmul.f32 %v403, %v880
    %v888 = vmul.f32 %v405, %v884
    %v889 = vlaneseq
    %v890 = vshrl.u32 %v889, 7
    %v891 = vsub.s32 2, %v890
    %v892 = vrot.slane %v848, %v891
    %v893 = vlaneseq
    %v894 = vshrl.u32 %v893, 7
    %v895 = vsub.s32 2, %v894
    %v896 = vrot.slane %v852, %v895
    %v897 = vlaneseq
    %v898 = vshrl.u32 %v897, 7
    %v899 = vsub.s32 2, %v898
    %v900 = vrot.slane %v856, %v899
    %v901 = vlaneseq
    %v902 = vshrl.u32 %v901, 7
    %v903 = vsub.s32 2, %v902
    %v904 = vrot.slane %v860, %v903
    %v905 = vmul.f32 %v474, %v892
    %v906 = vmul.f32 %v476, %v896
    %v907 = vmul.f32 %v515, %v900
    %v908 = vmul.f32 %v517, %v904
    %v909 = vadd.f32 %v885, %v905
    %v910 = vadd.f32 %v886, %v906
    %v911 = vadd.f32 %v887, %v907
    %v912 = vadd.f32 %v888, %v908
    %v913 = vadd.f32 %v695, %v865
    %v914 = vadd.f32 %v696, %v866
    %v915 = vadd.f32 %v697, %v867
    %v916 = vadd.f32 %v698, %v868
    %v919 = vlaneseq
    %v920 = vshrl.u32 %v919, 7
    %v921 = vsub.s32 0, %v920
    %v922 = vrot.slane %v521, %v921
    %v923 = vlaneseq
    %v924 = vshrl.u32 %v923, 7
    %v925 = vsub.s32 4, %v924
    %v926 = vrot.slane %v521, %v925
    %v927 = vlaneseq
    %v928 = vshrl.u32 %v927, 7
    %v929 = vsub.s32 0, %v928
    %v930 = vrot.slane %v522, %v929
    %v931 = vlaneseq
    %v932 = vshrl.u32 %v931, 7
    %v933 = vsub.s32 4, %v932
    %v934 = vrot.slane %v522, %v933
    %v939 = vadd.f32 %v913, %v922
    %v940 = vadd.f32 %v914, %v926
    %v941 = vadd.f32 %v915, %v930
    %v942 = vadd.f32 %v916, %v934
    %v943 = vlaneseq
    %v944 = vshrl.u32 %v943, 7
    %v945 = vsub.s32 0, %v944
    %v946 = vrot.slane %v939, %v945
    %v947 = vlaneseq
    %v948 = vshrl.u32 %v947, 7
    %v949 = vsub.s32 0, %v948
    %v950 = vrot.slane %v940, %v949
    %v951 = vlaneseq
    %v952 = vshrl.u32 %v951, 7
    %v953 = vsub.s32 0, %v952
    %v954 = vrot.slane %v941, %v953
    %v955 = vlaneseq
    %v956 = vshrl.u32 %v955, 7
    %v957 = vsub.s32 0, %v956
    %v958 = vrot.slane %v942, %v957
    %v959 = vadd.f32 %v909, %v946
    %v960 = vadd.f32 %v910, %v950
    %v961 = vadd.f32 %v911, %v954
    %v962 = vadd.f32 %v912, %v958
    %v963 = vxor.u32 %v959, 2147483648
    %v964 = vxor.u32 %v960, 2147483648
    %v965 = vxor.u32 %v961, 2147483648
    %v966 = vmul.f32 %v963, 1.442695
    %v967 = vpow.pop %v966
    %v968 = vmul.f32 %v964, 1.442695
    %v969 = vpow.pop %v968
    %v970 = vmul.f32 %v965, 1.442695
    %v971 = vpow.pop %v970
    %v972 = vadd.f32 %v967, 1.0
    %v973 = vadd.f32 %v969, 1.0
    %v974 = vadd.f32 %v971, 1.0
    %v975 = vrcp.pop %v972
    %v976 = vmul.f32 1.0, %v975
    %v977 = vrcp.pop %v973
    %v978 = vmul.f32 1.0, %v977
    %v979 = vrcp.pop %v974
    %v980 = vmul.f32 1.0, %v979
    %v981 = vtanh.pop %v962
    %v982 = vld [vmem:[#allocation9] sm:$0xff]
    %v983 = vmul.f32 %v976, %v982
    %v984 = vmul.f32 %v978, %v981
    %v985 = vadd.f32 %v983, %v984
    %v986 = vld [vmem:[%s7] sm:$0x3]
    %v987 = vld [vmem:[#allocation15] sm:$0x3]
    %v988 = vrot.slane %v985, 4
    %v989 = vadd.f32 %v985, %v988
    %v990 = vrot.slane %v989, 2
    %v991 = vadd.f32 %v989, %v990
    %v992 = vrot.slane %v991, 1
    %v993 = vadd.f32 %v991, %v992
    %v994 = vmul.f32 %v993, 0.125
    %v995 = vsub.f32 %v985, %v994
    %v996 = vmul.f32 %v995, %v995
    %v997 = vrot.slane %v996, 4
    %v998 = vadd.f32 %v996, %v997
    %v999 = vrot.slane %v998, 2
    %v1000 = vadd.f32 %v998, %v999
    %v1001 = vrot.slane %v1000, 1
    %v1002 = vadd.f32 %v1000, %v1001
    %v1003 = vmul.f32 %v1002, 0.14285715
    %v1004 = vmul.f32 %v994, 0.9
    %v1005 = vmul.f32 %v987, 0.1
    %v1006 = vadd.f32 %v1004, %v1005
    %v1007 = vmul.f32 %v1003, 0.9
    %v1008 = vadd.f32 %v1007, %v1005
    %v1009 = vadd.f32 %v1008, 1e-05
    %v1010 = vrcp.pop %v1009
    %v1012 = vrot.slane %v1010, 1
    %v1014 = vmul.f32 %v986, %v1012
    %v1015 = vsub.f32 0.0, %v1006
    %v1016 = vmul.f32 %v1015, %v1014
    %v1017 = vlaneseq
    %v1018 = vshrl.u32 %v1017, 7
    %v1019 = vsub.s32 0, %v1018
    %v1020 = vrot.slane %v1014, %v1019
    %v1021 = vmul.f32 %v985, %v1020
    %v1023 = vrot.slane %v986, 1
    %v1025 = vadd.f32 %v1016, %v1023
    %v1026 = vlaneseq
    %v1027 = vshrl.u32 %v1026, 7
    %v1028 = vsub.s32 0, %v1027
    %v1029 = vrot.slane %v1025, %v1028
    %v1030 = vadd.f32 %v1021, %v1029
    %v1031 = vtanh.pop %v1030
    %v1032 = vmul.f32 %v980, %v1031
    %1033 = vst [vmem:[#allocation16] sm:$0xff] %v1032
    %1034 = vst [vmem:[#allocation17] sm:$0xff] %v985
    // Predicated region
    $region66: #{tpu_custom_call.1} parent=1 // pred_check
      _
    $region67: #{tpu_custom_call.1} parent=1 // pred_check_branch
      %1036 = sbr.rel (0) target = $region69
    $region68: #{tpu_custom_call.1} parent=1 // pred_region
      %s1038 = ssub.s32 128, 128
      %1039 = vsyncadd [#allocation6], %s1038
      %s1041 = sshll.u32 [#allocation16], 4
      %s1042 = int_to_ptr.vmem [resolvable:$true] %s1041
      %1044 = dma.vmem_to_hbm [thread:$0]  %s1042, 128, %s10, [#allocation6]
    $region69: #{tpu_custom_call.1} parent=1 // pred_fallthru
      _
    // Predicated region
    $region70: #{tpu_custom_call.1} parent=1 // pred_check
      _
    $region71: #{tpu_custom_call.1} parent=1 // pred_check_branch
      %1046 = sbr.rel (0) target = $region73
    $region72: #{tpu_custom_call.1} parent=1 // pred_region
      %s1048 = ssub.s32 128, 128
      %1049 = vsyncadd [#allocation18], %s1048
      %s1051 = sshll.u32 [#allocation17], 4
      %s1052 = int_to_ptr.vmem [resolvable:$true] %s1051
      %1054 = dma.vmem_to_hbm [thread:$0]  %s1052, 128, %s11, [#allocation18]
    $region73: #{tpu_custom_call.1} parent=1 // pred_fallthru
      _
    // Predicated region
    $region74: #{tpu_custom_call.1} parent=1 // pred_check
      _
    $region75: #{tpu_custom_call.1} parent=1 // pred_check_branch
      %1056 = sbr.rel (0) target = $region77
    $region76: #{tpu_custom_call.1} parent=1 // pred_region
      %1057 = dma.done [#allocation6], 128
    $region77: #{tpu_custom_call.1} parent=1 // pred_fallthru
      _
    // Predicated region
    $region78: #{tpu_custom_call.1} parent=1 // pred_check
      _
    $region79: #{tpu_custom_call.1} parent=1 // pred_check_branch
      %1059 = sbr.rel (0) target = $region81
    $region80: #{tpu_custom_call.1} parent=1 // pred_region
      %1060 = dma.done [#allocation18], 128
    $region81: #{tpu_custom_call.1} parent=1 // pred_fallthru
      _
    %1061 = vsyncpa [#allocation5], 1
    %1062 = vsyncpa [#allocation8], 1
    %1063 = vsyncpa [#allocation11], 1
    %1064 = vsyncpa [#allocation14], 1
    %1065 = vsyncpa [#allocation6], 1
    %1066 = vsyncpa [#allocation18], 1

</llo_original>
